<compile_context>
chip_gen: v6e
topology: v6e:2x2x1
jax: 0.10.0
libtpu: 0.0.40
codegen_flags: <defaults>
</compile_context>

<pallas_src>
import functools

import jax
import jax.numpy as jnp
import numpy as np
from jax.experimental import pallas as pl
from jax.experimental.pallas import tpu as pltpu

PAD = 128          # lane-padded feature width for hidden/output layers
NUM_LAYERS = 4


def _round_up(n, m):
    return ((n + m - 1) // m) * m


def _choose_tb(B, block_b):
    """Pick a batch tile: multiple of 8, <= block_b, <=~12.5% batch padding,
    and (for larger batches) small enough that the grid has >= 2 steps so the
    'parallel' axis can shard across both TensorCores on v7x."""
    b8 = _round_up(max(B, 1), 8)
    cap = max(8, min(_round_up(block_b, 8), b8))
    if b8 >= 16:
        cap = min(cap, _round_up((b8 + 1) // 2, 8))   # >= 2 grid steps
    tb = max(cap, 8)
    while tb > 8 and (_round_up(B, tb) - B) * 8 > _round_up(B, tb):
        tb -= 8                                        # shrink until padding <= 12.5%
    return tb


def _mlp_kernel(x_ref, w1_ref, w_ref, b_ref, o_ref):
    """Fused 4-layer MLP on one batch tile.

    x_ref : (tb, state_dim) f32   raw activation tile (no lane padding in HBM)
    w1_ref: (state_dim, 128) bf16 layer-1 weights (zero-padded columns)
    w_ref : (384, 128) bf16       packed layers 2..4 (layer l rows (l-2)*128:(l-1)*128)
    b_ref : (8, 128) f32          packed biases (row l-1 = layer l bias)
    o_ref : (tb, 128) bf16        lane-dense output tile
    """
    # Layer 1: small-K matmul directly against the exact state_dim rows.
    xb = x_ref[...].astype(jnp.bfloat16)                      # (tb, state_dim)
    z = jnp.dot(xb, w1_ref[...], preferred_element_type=jnp.float32)
    z = z + b_ref[pl.ds(0, 1), :]
    h = jnp.maximum(z, 0.0).astype(jnp.bfloat16)              # f32 ReLU, bf16 for MXU

    for l in range(1, NUM_LAYERS):                            # static 3-layer unroll
        w = w_ref[pl.ds((l - 1) * PAD, PAD), :]               # (128, 128) bf16, static slice
        b = b_ref[pl.ds(l, 1), :]                             # (1, 128)   f32
        z = jnp.dot(h, w, preferred_element_type=jnp.float32) + b
        if l < NUM_LAYERS - 1:
            h = jnp.maximum(z, 0.0).astype(jnp.bfloat16)
        else:
            o_ref[...] = z.astype(o_ref.dtype)                # bf16, unmasked full-lane vst


def pack_params(params, pad=PAD):
    """Pack weights/biases into zero-padded slabs. Call ONCE (hoisted out of forward).

    Returns:
      w1    : (state_dim, pad) bf16
      w_rest: (3*pad, pad)     bf16   layers 2..4
      b_all : (8, pad)         f32    row l-1 = layer l bias (rows 4..7 unused)
    """
    state_dim, fo1 = params["w1"].shape
    assert fo1 <= pad
    w1 = jnp.zeros((state_dim, pad), jnp.float32).at[:, :fo1].set(params["w1"])
    w_rest = jnp.zeros(((NUM_LAYERS - 1) * pad, pad), jnp.float32)
    b_all = jnp.zeros((8, pad), jnp.float32)
    b_all = b_all.at[0, :fo1].set(params["b1"].reshape(-1))
    for l in range(2, NUM_LAYERS + 1):
        w = params[f"w{l}"]                                   # (fan_in, fan_out)
        b = params[f"b{l}"].reshape(-1)
        fi, fo = w.shape
        assert fi <= pad and fo <= pad
        r0 = (l - 2) * pad
        w_rest = w_rest.at[r0:r0 + fi, :fo].set(w)
        b_all = b_all.at[l - 1, :fo].set(b)
    return w1.astype(jnp.bfloat16), w_rest.astype(jnp.bfloat16), b_all


@functools.partial(jax.jit, static_argnames=("n_actions", "block_b"))
def acrobot_mlp_forward(x, packed, *, n_actions, block_b=1024):
    """x: (B, ...) float32.  packed: output of pack_params()."""
    w1, w_rest, b_all = packed
    # PyTorch: x = x.view(x.size(0), -1)
    x = x.reshape(x.shape[0], -1).astype(jnp.float32)
    B, state_dim = x.shape
    assert state_dim == w1.shape[0], "x feature dim must match layer-1 fan_in"

    tb = _choose_tb(B, block_b)
    b_pad = _round_up(B, tb)
    if b_pad != B:
        # Cheap batch-only pad on the raw 24 B/row input (no 128-lane slab in HBM).
        x = jnp.pad(x, ((0, b_pad - B), (0, 0)))

    grid = (b_pad // tb,)
    out = pl.pallas_call(
        _mlp_kernel,
        out_shape=jax.ShapeDtypeStruct((b_pad, PAD), jnp.bfloat16),
        grid=grid,
        in_specs=[
            pl.BlockSpec((tb, state_dim), lambda i: (i, 0)),                 # raw x tile
            pl.BlockSpec((state_dim, PAD), lambda i: (0, 0)),                # resident w1
            pl.BlockSpec(((NUM_LAYERS - 1) * PAD, PAD), lambda i: (0, 0)),   # resident w2..w4
            pl.BlockSpec((8, PAD), lambda i: (0, 0)),                        # resident biases
        ],
        out_specs=pl.BlockSpec((tb, PAD), lambda i: (i, 0)),
        compiler_params=pltpu.CompilerParams(
            dimension_semantics=("parallel",),        # megacore sharding on v7x
            vmem_limit_bytes=32 * 1024 * 1024,        # safe on v5e/v6e/v7x
        ),
    )(x, w1, w_rest, b_all)

    # Slice lane/batch padding off; return f32 like the PyTorch module.
    return out[:B, :n_actions].astype(jnp.float32)


def init_params(key, state_dim, n_actions):
    """Deterministic init matching PyTorch nn.Linear default: U(-1/sqrt(fan_in), +)."""
    dims = [(state_dim, 32), (32, 64), (64, 32), (32, n_actions)]
    params = {}
    for i, (fan_in, fan_out) in enumerate(dims, start=1):
        key, kw, kb = jax.random.split(key, 3)
        bound = 1.0 / np.sqrt(fan_in)
        params[f"w{i}"] = jax.random.uniform(
            kw, (fan_in, fan_out), jnp.float32, minval=-bound, maxval=bound)
        params[f"b{i}"] = jax.random.uniform(
            kb, (1, fan_out), jnp.float32, minval=-bound, maxval=bound)
    return params


def reference_forward(x, params, compute_dtype=jnp.float32):
    """Pure-JAX reference. compute_dtype=bf16 mirrors the kernel's MXU dtypes."""
    x = x.reshape(x.shape[0], -1)
    h = x
    for l in range(1, NUM_LAYERS + 1):
        w = params[f"w{l}"]
        b = params[f"b{l}"]
        z = jnp.dot(h.astype(compute_dtype), w.astype(compute_dtype),
                    preferred_element_type=jnp.float32) + b
        h = jnp.maximum(z, 0.0) if l < NUM_LAYERS else z
    return h


if __name__ == "__main__":
    state_dim = 6     # Acrobot-v1 observation dim
    n_actions = 3     # Acrobot-v1 action count
    batch = 8

    key = jax.random.PRNGKey(0)
    key, kx = jax.random.split(key)
    x = jax.random.normal(kx, (batch, state_dim), dtype=jnp.float32)
    params = init_params(key, state_dim, n_actions)
    packed = pack_params(params)   # pack once, reuse across forward calls

    # Single-tile case (B=8, grid=(1,)).
    out = jax.block_until_ready(
        acrobot_mlp_forward(x, packed, n_actions=n_actions))
    ref = reference_forward(x, params, compute_dtype=jnp.bfloat16)
    ref = ref.astype(jnp.bfloat16).astype(jnp.float32)   # mirror kernel's bf16 output rounding
    np.testing.assert_allclose(np.asarray(out), np.asarray(ref),
                               rtol=1e-2, atol=1e-2)

    # Multi-tile grid + ragged-batch padding case (B=20, tb=8 -> grid=(3,)).
    key, kx2 = jax.random.split(key)
    x2 = jax.random.normal(kx2, (20, state_dim), dtype=jnp.float32)
    out2 = jax.block_until_ready(
        acrobot_mlp_forward(x2, packed, n_actions=n_actions, block_b=8))
    ref2 = reference_forward(x2, params, compute_dtype=jnp.bfloat16)
    ref2 = ref2.astype(jnp.bfloat16).astype(jnp.float32)
    np.testing.assert_allclose(np.asarray(out2), np.asarray(ref2),
                               rtol=1e-2, atol=1e-2)

    print("KERNEL_OK")
</pallas_src>

<mosaic_0001>
module attributes {stable_mosaic.version = 11 : i64} {
  func.func @_mlp_kernel(%arg0: i32, %arg1: memref<8x6xf32, #tpu.memory_space<vmem>>, %arg2: memref<6x128xbf16, #tpu.memory_space<vmem>>, %arg3: memref<384x128xbf16, #tpu.memory_space<vmem>>, %arg4: memref<8x128xf32, #tpu.memory_space<vmem>>, %arg5: memref<8x128xbf16, #tpu.memory_space<vmem>>) attributes {dimension_semantics = [#tpu.dimension_semantics<parallel>], iteration_bounds = array<i64: 1>, scalar_prefetch = 0 : i64, scratch_operands = 0 : i64, tpu.core_type = #tpu.core_type<tc>, window_params = [{transform_indices = @transform_0, window_bounds = array<i64: 8, 6>}, {pipeline_mode = #tpu.pipeline_mode<synchronous>, transform_indices = @transform_1, window_bounds = array<i64: 6, 128>}, {pipeline_mode = #tpu.pipeline_mode<synchronous>, transform_indices = @transform_2, window_bounds = array<i64: 384, 128>}, {pipeline_mode = #tpu.pipeline_mode<synchronous>, transform_indices = @transform_3, window_bounds = array<i64: 8, 128>}, {transform_indices = @transform_4, window_bounds = array<i64: 8, 128>}]} {
    %c0 = arith.constant 0 : index
    %c0_0 = arith.constant 0 : index
    %0 = vector.load %arg1[%c0, %c0_0] : memref<8x6xf32, #tpu.memory_space<vmem>>, vector<8x6xf32>
    %1 = arith.truncf %0 : vector<8x6xf32> to vector<8x6xbf16>
    %c0_1 = arith.constant 0 : index
    %c0_2 = arith.constant 0 : index
    %2 = vector.load %arg2[%c0_1, %c0_2] : memref<6x128xbf16, #tpu.memory_space<vmem>>, vector<6x128xbf16>
    %cst = arith.constant dense<0.000000e+00> : vector<8x128xf32>
    %3 = tpu.matmul %1, %2, %cst {dimension_numbers = #tpu.dot_dimension_numbers<[1], [0], [0], [1], [0, 0, 1, 1], [], []>} : vector<8x6xbf16>, vector<6x128xbf16>, vector<8x128xf32> -> vector<8x128xf32>
    %c0_3 = arith.constant 0 : index
    %c0_4 = arith.constant 0 : index
    %4 = vector.load %arg4[%c0_3, %c0_4] : memref<8x128xf32, #tpu.memory_space<vmem>>, vector<1x128xf32>
    %5 = vector.broadcast %4 : vector<1x128xf32> to vector<8x128xf32>
    %6 = arith.addf %3, %5 : vector<8x128xf32>
    %cst_5 = arith.constant 0.000000e+00 : f32
    %7 = vector.broadcast %cst_5 : f32 to vector<8x128xf32>
    %8 = arith.maximumf %6, %7 : vector<8x128xf32>
    %9 = arith.truncf %8 : vector<8x128xf32> to vector<8x128xbf16>
    %c0_6 = arith.constant 0 : index
    %c0_7 = arith.constant 0 : index
    %10 = vector.load %arg3[%c0_6, %c0_7] : memref<384x128xbf16, #tpu.memory_space<vmem>>, vector<128x128xbf16>
    %c1 = arith.constant 1 : index
    %c0_8 = arith.constant 0 : index
    %11 = vector.load %arg4[%c1, %c0_8] : memref<8x128xf32, #tpu.memory_space<vmem>>, vector<1x128xf32>
    %cst_9 = arith.constant dense<0.000000e+00> : vector<8x128xf32>
    %12 = tpu.matmul %9, %10, %cst_9 {dimension_numbers = #tpu.dot_dimension_numbers<[1], [0], [0], [1], [0, 0, 1, 1], [], []>} : vector<8x128xbf16>, vector<128x128xbf16>, vector<8x128xf32> -> vector<8x128xf32>
    %13 = vector.broadcast %11 : vector<1x128xf32> to vector<8x128xf32>
    %14 = arith.addf %12, %13 : vector<8x128xf32>
    %cst_10 = arith.constant 0.000000e+00 : f32
    %15 = vector.broadcast %cst_10 : f32 to vector<8x128xf32>
    %16 = arith.maximumf %14, %15 : vector<8x128xf32>
    %17 = arith.truncf %16 : vector<8x128xf32> to vector<8x128xbf16>
    %c128 = arith.constant 128 : index
    %c0_11 = arith.constant 0 : index
    %18 = vector.load %arg3[%c128, %c0_11] : memref<384x128xbf16, #tpu.memory_space<vmem>>, vector<128x128xbf16>
    %c2 = arith.constant 2 : index
    %c0_12 = arith.constant 0 : index
    %19 = vector.load %arg4[%c2, %c0_12] : memref<8x128xf32, #tpu.memory_space<vmem>>, vector<1x128xf32>
    %cst_13 = arith.constant dense<0.000000e+00> : vector<8x128xf32>
    %20 = tpu.matmul %17, %18, %cst_13 {dimension_numbers = #tpu.dot_dimension_numbers<[1], [0], [0], [1], [0, 0, 1, 1], [], []>} : vector<8x128xbf16>, vector<128x128xbf16>, vector<8x128xf32> -> vector<8x128xf32>
    %21 = vector.broadcast %19 : vector<1x128xf32> to vector<8x128xf32>
    %22 = arith.addf %20, %21 : vector<8x128xf32>
    %cst_14 = arith.constant 0.000000e+00 : f32
    %23 = vector.broadcast %cst_14 : f32 to vector<8x128xf32>
    %24 = arith.maximumf %22, %23 : vector<8x128xf32>
    %25 = arith.truncf %24 : vector<8x128xf32> to vector<8x128xbf16>
    %c256 = arith.constant 256 : index
    %c0_15 = arith.constant 0 : index
    %26 = vector.load %arg3[%c256, %c0_15] : memref<384x128xbf16, #tpu.memory_space<vmem>>, vector<128x128xbf16>
    %c3 = arith.constant 3 : index
    %c0_16 = arith.constant 0 : index
    %27 = vector.load %arg4[%c3, %c0_16] : memref<8x128xf32, #tpu.memory_space<vmem>>, vector<1x128xf32>
    %cst_17 = arith.constant dense<0.000000e+00> : vector<8x128xf32>
    %28 = tpu.matmul %25, %26, %cst_17 {dimension_numbers = #tpu.dot_dimension_numbers<[1], [0], [0], [1], [0, 0, 1, 1], [], []>} : vector<8x128xbf16>, vector<128x128xbf16>, vector<8x128xf32> -> vector<8x128xf32>
    %29 = vector.broadcast %27 : vector<1x128xf32> to vector<8x128xf32>
    %30 = arith.addf %28, %29 : vector<8x128xf32>
    %31 = arith.truncf %30 : vector<8x128xf32> to vector<8x128xbf16>
    %c0_18 = arith.constant 0 : index
    %c0_19 = arith.constant 0 : index
    %32 = vector.load %arg5[%c0_18, %c0_19] : memref<8x128xbf16, #tpu.memory_space<vmem>>, vector<8x128xbf16>
    tpu.vector_store %arg5[%c0_18, %c0_19], %31 {strides = array<i32>} : memref<8x128xbf16, #tpu.memory_space<vmem>>, vector<8x128xbf16>,
    return
  }
  func.func @transform_0(%arg0: i32) -> (i32, i32) {
    %c0_i32 = arith.constant 0 : i32
    %c0_i32_0 = arith.constant 0 : i32
    return %arg0, %c0_i32 : i32, i32
  }
  func.func @transform_1(%arg0: i32) -> (i32, i32) {
    %c0_i32 = arith.constant 0 : i32
    %c0_i32_0 = arith.constant 0 : i32
    %c0_i32_1 = arith.constant 0 : i32
    return %c0_i32, %c0_i32_0 : i32, i32
  }
  func.func @transform_2(%arg0: i32) -> (i32, i32) {
    %c0_i32 = arith.constant 0 : i32
    %c0_i32_0 = arith.constant 0 : i32
    %c0_i32_1 = arith.constant 0 : i32
    return %c0_i32, %c0_i32_0 : i32, i32
  }
  func.func @transform_3(%arg0: i32) -> (i32, i32) {
    %c0_i32 = arith.constant 0 : i32
    %c0_i32_0 = arith.constant 0 : i32
    %c0_i32_1 = arith.constant 0 : i32
    return %c0_i32, %c0_i32_0 : i32, i32
  }
  func.func @transform_4(%arg0: i32) -> (i32, i32) {
    %c0_i32 = arith.constant 0 : i32
    %c0_i32_0 = arith.constant 0 : i32
    return %arg0, %c0_i32 : i32, i32
  }
}

</mosaic_0001>

<llo_original>
// kernel: acrobot_mlp_forward.1
$region0: #{acrobot_mlp_forward.1}
  #allocation0 [shape = 'u32[]', space=smem, size = 0x4, offset = 0x4, fixed_abs, tag = 'smem constant byte address 0x4 - core index']
  #allocation1 [shape = 'u32[144,128]{1,0:T(1,128)}', space=vmem, size = 0x12000, scoped, tag = 'internal scratch']
  %s0 = inlined_call_operand.hbm [shape: f32[8,6], index: 0, kind: input, shape index: {}]
  %s1 = inlined_call_operand.hbm [shape: bf16[6,128], index: 1, kind: input, shape index: {}]
  %s2 = inlined_call_operand.hbm [shape: bf16[384,128], index: 2, kind: input, shape index: {}]
  %s3 = inlined_call_operand.hbm [shape: f32[8,128], index: 3, kind: input, shape index: {}]
  %s4 = inlined_call_operand.vmem [shape: bf16[8,128], index: 4, kind: output, shape index: {}]
  %s5 = sld [smem:[#allocation0]]
  $region42: #{acrobot_mlp_forward.1} parent=0
    _
  %s7 = ssub.s32 1, %s5
  %s8 = scalar_select 0, %s7, %s5
  $region1: #{acrobot_mlp_forward.1} parent=0
    #allocation2 [shape = 'u8[4096]{0}', space=vmem, size = 0x1000, scoped, tag = 'input window, operand 0, single buffered']
    #allocation3 [shape = 's32[1]{0}', space=sflag, size = 0x4, scoped, tag = 'scoped memory for acrobot_mlp_forward.1']
    #allocation4 [shape = 'u8[2048]{0}', space=vmem, size = 0x800, scoped, tag = 'input window, operand 1, single buffered']
    #allocation5 [shape = 's32[1]{0}', space=sflag, size = 0x4, scoped, tag = 'scoped memory for acrobot_mlp_forward.1']
    #allocation6 [shape = 'u8[98304]{0}', space=vmem, size = 0x18000, scoped, tag = 'input window, operand 2, single buffered']
    #allocation7 [shape = 'u8[4096]{0}', space=vmem, size = 0x1000, scoped, tag = 'input window, operand 3, single buffered']
    #allocation8 [shape = 's32[1]{0}', space=sflag, size = 0x4, scoped, tag = 'scoped memory for acrobot_mlp_forward.1']
    %9 = vsyncpa [#allocation3], 0
    %10 = vsyncpa [#allocation5], 0
    %11 = vsyncpa [#allocation8], 0
    // Predicated region
    $region2: #{acrobot_mlp_forward.1} parent=1 // pred_check
      _
    $region3: #{acrobot_mlp_forward.1} parent=1 // pred_check_branch
      %13 = sbr.rel (0) target = $region5
    $region4: #{acrobot_mlp_forward.1} parent=1 // pred_region
      %s15 = ssub.s32 128, 128
      %16 = vsyncadd [#allocation3], %s15
      %s18 = sshll.u32 [#allocation2], 4
      %s19 = int_to_ptr.vmem [resolvable:$true] %s18
      %21 = dma.hbm_to_vmem [thread:$0]  %s0, 128, %s19, [#allocation3]
    $region5: #{acrobot_mlp_forward.1} parent=1 // pred_fallthru
      _
    // Predicated region
    $region6: #{acrobot_mlp_forward.1} parent=1 // pred_check
      _
    $region7: #{acrobot_mlp_forward.1} parent=1 // pred_check_branch
      %23 = sbr.rel (0) target = $region9
    $region8: #{acrobot_mlp_forward.1} parent=1 // pred_region
      %s25 = ssub.s32 64, 64
      %26 = vsyncadd [#allocation5], %s25
      %s28 = sshll.u32 [#allocation4], 4
      %s29 = int_to_ptr.vmem [resolvable:$true] %s28
      %31 = dma.hbm_to_vmem [thread:$0]  %s1, 64, %s29, [#allocation5]
    $region9: #{acrobot_mlp_forward.1} parent=1 // pred_fallthru
      _
    // Predicated region
    $region10: #{acrobot_mlp_forward.1} parent=1 // pred_check
      _
    $region11: #{acrobot_mlp_forward.1} parent=1 // pred_check_branch
      %33 = sbr.rel (0) target = $region13
    $region12: #{acrobot_mlp_forward.1} parent=1 // pred_region
      %s35 = ssub.s32 3072, 3072
      %36 = vsyncadd [#allocation5], %s35
      %s37 = sshll.u32 [#allocation6], 4
      %s38 = int_to_ptr.vmem [resolvable:$true] %s37
      %43 = dma.hbm_to_vmem [thread:$0]  %s2, 3072, %s38, [#allocation5], 64, 64, 4
    $region13: #{acrobot_mlp_forward.1} parent=1 // pred_fallthru
      _
    // Predicated region
    $region14: #{acrobot_mlp_forward.1} parent=1 // pred_check
      _
    $region15: #{acrobot_mlp_forward.1} parent=1 // pred_check_branch
      %45 = sbr.rel (0) target = $region17
    $region16: #{acrobot_mlp_forward.1} parent=1 // pred_region
      %s47 = ssub.s32 128, 128
      %48 = vsyncadd [#allocation8], %s47
      %s50 = sshll.u32 [#allocation7], 4
      %s51 = int_to_ptr.vmem [resolvable:$true] %s50
      %53 = dma.hbm_to_vmem [thread:$0]  %s3, 128, %s51, [#allocation8]
    $region17: #{acrobot_mlp_forward.1} parent=1 // pred_fallthru
      _
    // Predicated region
    $region18: #{acrobot_mlp_forward.1} parent=1 // pred_check
      _
    $region19: #{acrobot_mlp_forward.1} parent=1 // pred_check_branch
      %55 = sbr.rel (0) target = $region21
    $region20: #{acrobot_mlp_forward.1} parent=1 // pred_region
      %56 = dma.done [#allocation3], 128
    $region21: #{acrobot_mlp_forward.1} parent=1 // pred_fallthru
      _
    // Predicated region
    $region22: #{acrobot_mlp_forward.1} parent=1 // pred_check
      _
    $region23: #{acrobot_mlp_forward.1} parent=1 // pred_check_branch
      %58 = sbr.rel (0) target = $region25
    $region24: #{acrobot_mlp_forward.1} parent=1 // pred_region
      %59 = dma.done [#allocation5], 64
    $region25: #{acrobot_mlp_forward.1} parent=1 // pred_fallthru
      _
    // Predicated region
    $region26: #{acrobot_mlp_forward.1} parent=1 // pred_check
      _
    $region27: #{acrobot_mlp_forward.1} parent=1 // pred_check_branch
      %61 = sbr.rel (0) target = $region29
    $region28: #{acrobot_mlp_forward.1} parent=1 // pred_region
      %62 = dma.done [#allocation5], 3072
    $region29: #{acrobot_mlp_forward.1} parent=1 // pred_fallthru
      _
    // Predicated region
    $region30: #{acrobot_mlp_forward.1} parent=1 // pred_check
      _
    $region31: #{acrobot_mlp_forward.1} parent=1 // pred_check_branch
      %64 = sbr.rel (0) target = $region33
    $region32: #{acrobot_mlp_forward.1} parent=1 // pred_region
      %65 = dma.done [#allocation8], 128
    $region33: #{acrobot_mlp_forward.1} parent=1 // pred_fallthru
      _
    %v67 = vld [vmem:[#allocation2] sm:$0xff]
    %v68 = vpack.c.bf16 %v67, %v67
    %v69 = vld [vmem:[#allocation4] sm:$0x7]
    %v70 = vld [vmem:[#allocation7] sm:$0x1]
    %v71 = vlaneseq
    %v72 = vshrl.u32 %v71, 7
    %v73 = vsub.s32 0, %v72
    %v74 = vrot.slane %v70, %v73
    %vm75 = vcmask 48128
    %v77 = vsel %vm75, %v68, 0
    %vm79 = vcmask 1042432
    %v81 = vsel %vm79, %v69, 0
    %83 = vmatprep.subr.bf16.mxu0 0
    %84 = vmatpush1.bf16.msra.mxu0 0
    %85 = vmatprep.subr.bf16.mxu0 0
    %86 = vmatpush1.bf16.msra.mxu0 0
    %87 = vmatprep.subr.bf16.mxu0 0
    %88 = vmatpush1.bf16.msra.mxu0 0
    %89 = vmatprep.subr.bf16.mxu0 0
    %90 = vmatpush1.bf16.msra.mxu0 0
    %91 = vmatprep.subr.bf16.mxu0 0
    %92 = vmatpush1.bf16.msra.mxu0 0
    %93 = vmatprep.subr.bf16.mxu0 0
    %94 = vmatpush1.bf16.msra.mxu0 0
    %95 = vmatprep.subr.bf16.mxu0 0
    %96 = vmatpush1.bf16.msra.mxu0 0
    %97 = vmatprep.subr.bf16.mxu0 0
    %98 = vmatpush1.bf16.msra.mxu0 %v81
    %99 = vmatprep.subr.bf16.mxu0 0
    %100 = vmatpush2.bf16.msra.mxu0 0
    %101 = vmatprep.subr.bf16.mxu0 0
    %102 = vmatpush2.bf16.msra.mxu0 0
    %103 = vmatprep.subr.bf16.mxu0 0
    %104 = vmatpush2.bf16.msra.mxu0 0
    %105 = vmatprep.subr.bf16.mxu0 0
    %106 = vmatpush2.bf16.msra.mxu0 0
    %107 = vmatprep.subr.bf16.mxu0 0
    %108 = vmatpush2.bf16.msra.mxu0 0
    %109 = vmatprep.subr.bf16.mxu0 0
    %110 = vmatpush2.bf16.msra.mxu0 0
    %111 = vmatprep.subr.bf16.mxu0 0
    %112 = vmatpush2.bf16.msra.mxu0 0
    %113 = vmatprep.subr.bf16.mxu0 0
    %114 = vmatpush2.bf16.msra.mxu0 0
    %115 = vmatprep.mubr.bf16.mxu0 0
    %116 = vmatmul.mubr.bf16.gmra.mxu0 %v77
    %v117 = vpop.f32.mrf.mxu0
    %v118 = vadd.f32 %v74, %v117
    %v119 = vpop.f32.mrf.mxu0
    %v120 = vpop.f32.mrf.mxu0
    %v121 = vpop.f32.mrf.mxu0
    %122 = vdwg.mxu0
    %v123 = vmax.f32 %v118, 0.0
    %v124 = vpack.c.bf16 %v123, %v123
    %v125 = vld [vmem:[#allocation6] sm:$0xf]
    %v126 = vld [vmem:[#allocation6 + $0x4] sm:$0xf]
    %v127 = vld [vmem:[#allocation6 + $0x8] sm:$0xf]
    %v128 = vld [vmem:[#allocation6 + $0xc] sm:$0xf]
    %v129 = vld [vmem:[#allocation6 + $0x10] sm:$0xf]
    %v130 = vld [vmem:[#allocation6 + $0x14] sm:$0xf]
    %v131 = vld [vmem:[#allocation6 + $0x18] sm:$0xf]
    %v132 = vld [vmem:[#allocation6 + $0x1c] sm:$0xf]
    %v133 = vld [vmem:[#allocation6 + $0x20] sm:$0xf]
    %v134 = vld [vmem:[#allocation6 + $0x24] sm:$0xf]
    %v135 = vld [vmem:[#allocation6 + $0x28] sm:$0xf]
    %v136 = vld [vmem:[#allocation6 + $0x2c] sm:$0xf]
    %v137 = vld [vmem:[#allocation6 + $0x30] sm:$0xf]
    %v138 = vld [vmem:[#allocation6 + $0x34] sm:$0xf]
    %v139 = vld [vmem:[#allocation6 + $0x38] sm:$0xf]
    %v140 = vld [vmem:[#allocation6 + $0x3c] sm:$0xf]
    %v141 = vld [vmem:[#allocation7 + $0x1] sm:$0x1]
    %v142 = vlaneseq
    %v143 = vshrl.u32 %v142, 7
    %v144 = vsub.s32 0, %v143
    %v145 = vrot.slane %v141, %v144
    %v162 = vunpack.c.l.b16 %v125
    %v163 = vunpack.c.l.b16 %v126
    %v164 = vunpack.c.l.b16 %v127
    %v165 = vunpack.c.l.b16 %v128
    %v166 = vunpack.c.l.b16 %v129
    %v167 = vunpack.c.l.b16 %v130
    %v168 = vunpack.c.l.b16 %v131
    %v169 = vunpack.c.l.b16 %v132
    %v170 = vunpack.c.l.b16 %v133
    %v171 = vunpack.c.l.b16 %v134
    %v172 = vunpack.c.l.b16 %v135
    %v173 = vunpack.c.l.b16 %v136
    %v174 = vunpack.c.l.b16 %v137
    %v175 = vunpack.c.l.b16 %v138
    %v176 = vunpack.c.l.b16 %v139
    %v177 = vunpack.c.l.b16 %v140
    %v178 = vpack.c.b16 %v163, %v162
    %v179 = vpack.c.b16 %v165, %v164
    %v180 = vpack.c.b16 %v167, %v166
    %v181 = vpack.c.b16 %v169, %v168
    %v182 = vpack.c.b16 %v171, %v170
    %v183 = vpack.c.b16 %v173, %v172
    %v184 = vpack.c.b16 %v175, %v174
    %v185 = vpack.c.b16 %v177, %v176
    %194 = vmatprep.subr.bf16.mxu0 0
    %195 = vmatpush1.bf16.msra.mxu0 %v185
    %196 = vmatprep.subr.bf16.mxu0 0
    %197 = vmatpush1.bf16.msra.mxu0 %v184
    %198 = vmatprep.subr.bf16.mxu0 0
    %199 = vmatpush1.bf16.msra.mxu0 %v183
    %200 = vmatprep.subr.bf16.mxu0 0
    %201 = vmatpush1.bf16.msra.mxu0 %v182
    %202 = vmatprep.subr.bf16.mxu0 0
    %203 = vmatpush1.bf16.msra.mxu0 %v181
    %204 = vmatprep.subr.bf16.mxu0 0
    %205 = vmatpush1.bf16.msra.mxu0 %v180
    %206 = vmatprep.subr.bf16.mxu0 0
    %207 = vmatpush1.bf16.msra.mxu0 %v179
    %208 = vmatprep.subr.bf16.mxu0 0
    %209 = vmatpush1.bf16.msra.mxu0 %v178
    %210 = vmatprep.subr.bf16.mxu0 0
    %211 = vmatpush2.bf16.msra.mxu0 0
    %212 = vmatprep.subr.bf16.mxu0 0
    %213 = vmatpush2.bf16.msra.mxu0 0
    %214 = vmatprep.subr.bf16.mxu0 0
    %215 = vmatpush2.bf16.msra.mxu0 0
    %216 = vmatprep.subr.bf16.mxu0 0
    %217 = vmatpush2.bf16.msra.mxu0 0
    %218 = vmatprep.subr.bf16.mxu0 0
    %219 = vmatpush2.bf16.msra.mxu0 0
    %220 = vmatprep.subr.bf16.mxu0 0
    %221 = vmatpush2.bf16.msra.mxu0 0
    %222 = vmatprep.subr.bf16.mxu0 0
    %223 = vmatpush2.bf16.msra.mxu0 0
    %224 = vmatprep.subr.bf16.mxu0 0
    %225 = vmatpush2.bf16.msra.mxu0 0
    %226 = vmatprep.mubr.bf16.mxu0 0
    %227 = vmatmul.mubr.bf16.gmra.mxu0 %v124
    %v228 = vpop.f32.mrf.mxu0
    %v229 = vadd.f32 %v145, %v228
    %v230 = vpop.f32.mrf.mxu0
    %v231 = vpop.f32.mrf.mxu0
    %v232 = vpop.f32.mrf.mxu0
    %233 = vdwg.mxu0
    %v234 = vmax.f32 %v229, 0.0
    %v235 = vpack.c.bf16 %v234, %v234
    %v236 = vld [vmem:[#allocation6 + $0x40] sm:$0xf]
    %v237 = vld [vmem:[#allocation6 + $0x44] sm:$0xf]
    %v238 = vld [vmem:[#allocation6 + $0x48] sm:$0xf]
    %v239 = vld [vmem:[#allocation6 + $0x4c] sm:$0xf]
    %v240 = vld [vmem:[#allocation6 + $0x50] sm:$0xf]
    %v241 = vld [vmem:[#allocation6 + $0x54] sm:$0xf]
    %v242 = vld [vmem:[#allocation6 + $0x58] sm:$0xf]
    %v243 = vld [vmem:[#allocation6 + $0x5c] sm:$0xf]
    %v244 = vld [vmem:[#allocation6 + $0x60] sm:$0xf]
    %v245 = vld [vmem:[#allocation6 + $0x64] sm:$0xf]
    %v246 = vld [vmem:[#allocation6 + $0x68] sm:$0xf]
    %v247 = vld [vmem:[#allocation6 + $0x6c] sm:$0xf]
    %v248 = vld [vmem:[#allocation6 + $0x70] sm:$0xf]
    %v249 = vld [vmem:[#allocation6 + $0x74] sm:$0xf]
    %v250 = vld [vmem:[#allocation6 + $0x78] sm:$0xf]
    %v251 = vld [vmem:[#allocation6 + $0x7c] sm:$0xf]
    %v252 = vld [vmem:[#allocation7 + $0x2] sm:$0x1]
    %v253 = vlaneseq
    %v254 = vshrl.u32 %v253, 7
    %v255 = vsub.s32 0, %v254
    %v256 = vrot.slane %v252, %v255
    %v273 = vunpack.c.l.b16 %v236
    %v274 = vunpack.c.l.b16 %v237
    %v275 = vunpack.c.l.b16 %v238
    %v276 = vunpack.c.l.b16 %v239
    %v277 = vunpack.c.l.b16 %v240
    %v278 = vunpack.c.l.b16 %v241
    %v279 = vunpack.c.l.b16 %v242
    %v280 = vunpack.c.l.b16 %v243
    %v281 = vunpack.c.l.b16 %v244
    %v282 = vunpack.c.l.b16 %v245
    %v283 = vunpack.c.l.b16 %v246
    %v284 = vunpack.c.l.b16 %v247
    %v285 = vunpack.c.l.b16 %v248
    %v286 = vunpack.c.l.b16 %v249
    %v287 = vunpack.c.l.b16 %v250
    %v288 = vunpack.c.l.b16 %v251
    %v289 = vpack.c.b16 %v274, %v273
    %v290 = vpack.c.b16 %v276, %v275
    %v291 = vpack.c.b16 %v278, %v277
    %v292 = vpack.c.b16 %v280, %v279
    %v293 = vpack.c.b16 %v282, %v281
    %v294 = vpack.c.b16 %v284, %v283
    %v295 = vpack.c.b16 %v286, %v285
    %v296 = vpack.c.b16 %v288, %v287
    %305 = vmatprep.subr.bf16.mxu0 0
    %306 = vmatpush1.bf16.msra.mxu0 %v296
    %307 = vmatprep.subr.bf16.mxu0 0
    %308 = vmatpush1.bf16.msra.mxu0 %v295
    %309 = vmatprep.subr.bf16.mxu0 0
    %310 = vmatpush1.bf16.msra.mxu0 %v294
    %311 = vmatprep.subr.bf16.mxu0 0
    %312 = vmatpush1.bf16.msra.mxu0 %v293
    %313 = vmatprep.subr.bf16.mxu0 0
    %314 = vmatpush1.bf16.msra.mxu0 %v292
    %315 = vmatprep.subr.bf16.mxu0 0
    %316 = vmatpush1.bf16.msra.mxu0 %v291
    %317 = vmatprep.subr.bf16.mxu0 0
    %318 = vmatpush1.bf16.msra.mxu0 %v290
    %319 = vmatprep.subr.bf16.mxu0 0
    %320 = vmatpush1.bf16.msra.mxu0 %v289
    %321 = vmatprep.subr.bf16.mxu0 0
    %322 = vmatpush2.bf16.msra.mxu0 0
    %323 = vmatprep.subr.bf16.mxu0 0
    %324 = vmatpush2.bf16.msra.mxu0 0
    %325 = vmatprep.subr.bf16.mxu0 0
    %326 = vmatpush2.bf16.msra.mxu0 0
    %327 = vmatprep.subr.bf16.mxu0 0
    %328 = vmatpush2.bf16.msra.mxu0 0
    %329 = vmatprep.subr.bf16.mxu0 0
    %330 = vmatpush2.bf16.msra.mxu0 0
    %331 = vmatprep.subr.bf16.mxu0 0
    %332 = vmatpush2.bf16.msra.mxu0 0
    %333 = vmatprep.subr.bf16.mxu0 0
    %334 = vmatpush2.bf16.msra.mxu0 0
    %335 = vmatprep.subr.bf16.mxu0 0
    %336 = vmatpush2.bf16.msra.mxu0 0
    %337 = vmatprep.mubr.bf16.mxu0 0
    %338 = vmatmul.mubr.bf16.gmra.mxu0 %v235
    %v339 = vpop.f32.mrf.mxu0
    %v340 = vadd.f32 %v256, %v339
    %v341 = vpop.f32.mrf.mxu0
    %v342 = vpop.f32.mrf.mxu0
    %v343 = vpop.f32.mrf.mxu0
    %344 = vdwg.mxu0
    %v345 = vmax.f32 %v340, 0.0
    %v346 = vpack.c.bf16 %v345, %v345
    %v347 = vld [vmem:[#allocation6 + $0x80] sm:$0xf]
    %v348 = vld [vmem:[#allocation6 + $0x84] sm:$0xf]
    %v349 = vld [vmem:[#allocation6 + $0x88] sm:$0xf]
    %v350 = vld [vmem:[#allocation6 + $0x8c] sm:$0xf]
    %v351 = vld [vmem:[#allocation6 + $0x90] sm:$0xf]
    %v352 = vld [vmem:[#allocation6 + $0x94] sm:$0xf]
    %v353 = vld [vmem:[#allocation6 + $0x98] sm:$0xf]
    %v354 = vld [vmem:[#allocation6 + $0x9c] sm:$0xf]
    %v355 = vld [vmem:[#allocation6 + $0xa0] sm:$0xf]
    %v356 = vld [vmem:[#allocation6 + $0xa4] sm:$0xf]
    %v357 = vld [vmem:[#allocation6 + $0xa8] sm:$0xf]
    %v358 = vld [vmem:[#allocation6 + $0xac] sm:$0xf]
    %v359 = vld [vmem:[#allocation6 + $0xb0] sm:$0xf]
    %v360 = vld [vmem:[#allocation6 + $0xb4] sm:$0xf]
    %v361 = vld [vmem:[#allocation6 + $0xb8] sm:$0xf]
    %v362 = vld [vmem:[#allocation6 + $0xbc] sm:$0xf]
    %v363 = vld [vmem:[#allocation7 + $0x3] sm:$0x1]
    %v364 = vlaneseq
    %v365 = vshrl.u32 %v364, 7
    %v366 = vsub.s32 0, %v365
    %v367 = vrot.slane %v363, %v366
    %v384 = vunpack.c.l.b16 %v347
    %v385 = vunpack.c.l.b16 %v348
    %v386 = vunpack.c.l.b16 %v349
    %v387 = vunpack.c.l.b16 %v350
    %v388 = vunpack.c.l.b16 %v351
    %v389 = vunpack.c.l.b16 %v352
    %v390 = vunpack.c.l.b16 %v353
    %v391 = vunpack.c.l.b16 %v354
    %v392 = vunpack.c.l.b16 %v355
    %v393 = vunpack.c.l.b16 %v356
    %v394 = vunpack.c.l.b16 %v357
    %v395 = vunpack.c.l.b16 %v358
    %v396 = vunpack.c.l.b16 %v359
    %v397 = vunpack.c.l.b16 %v360
    %v398 = vunpack.c.l.b16 %v361
    %v399 = vunpack.c.l.b16 %v362
    %v400 = vpack.c.b16 %v385, %v384
    %v401 = vpack.c.b16 %v387, %v386
    %v402 = vpack.c.b16 %v389, %v388
    %v403 = vpack.c.b16 %v391, %v390
    %v404 = vpack.c.b16 %v393, %v392
    %v405 = vpack.c.b16 %v395, %v394
    %v406 = vpack.c.b16 %v397, %v396
    %v407 = vpack.c.b16 %v399, %v398
    %416 = vmatprep.subr.bf16.mxu0 0
    %417 = vmatpush1.bf16.msra.mxu0 %v407
    %418 = vmatprep.subr.bf16.mxu0 0
    %419 = vmatpush1.bf16.msra.mxu0 %v406
    %420 = vmatprep.subr.bf16.mxu0 0
    %421 = vmatpush1.bf16.msra.mxu0 %v405
    %422 = vmatprep.subr.bf16.mxu0 0
    %423 = vmatpush1.bf16.msra.mxu0 %v404
    %424 = vmatprep.subr.bf16.mxu0 0
    %425 = vmatpush1.bf16.msra.mxu0 %v403
    %426 = vmatprep.subr.bf16.mxu0 0
    %427 = vmatpush1.bf16.msra.mxu0 %v402
    %428 = vmatprep.subr.bf16.mxu0 0
    %429 = vmatpush1.bf16.msra.mxu0 %v401
    %430 = vmatprep.subr.bf16.mxu0 0
    %431 = vmatpush1.bf16.msra.mxu0 %v400
    %432 = vmatprep.subr.bf16.mxu0 0
    %433 = vmatpush2.bf16.msra.mxu0 0
    %434 = vmatprep.subr.bf16.mxu0 0
    %435 = vmatpush2.bf16.msra.mxu0 0
    %436 = vmatprep.subr.bf16.mxu0 0
    %437 = vmatpush2.bf16.msra.mxu0 0
    %438 = vmatprep.subr.bf16.mxu0 0
    %439 = vmatpush2.bf16.msra.mxu0 0
    %440 = vmatprep.subr.bf16.mxu0 0
    %441 = vmatpush2.bf16.msra.mxu0 0
    %442 = vmatprep.subr.bf16.mxu0 0
    %443 = vmatpush2.bf16.msra.mxu0 0
    %444 = vmatprep.subr.bf16.mxu0 0
    %445 = vmatpush2.bf16.msra.mxu0 0
    %446 = vmatprep.subr.bf16.mxu0 0
    %447 = vmatpush2.bf16.msra.mxu0 0
    %448 = vmatprep.mubr.bf16.mxu0 0
    %449 = vmatmul.mubr.bf16.gmra.mxu0 %v346
    %v450 = vpop.f32.mrf.mxu0
    %v451 = vadd.f32 %v367, %v450
    %v452 = vpop.f32.mrf.mxu0
    %v453 = vpop.f32.mrf.mxu0
    %v454 = vpop.f32.mrf.mxu0
    %455 = vdwg.mxu0
    %v456 = vpack.c.bf16 %v451, %v451
    %457 = vst [vmem:[%s4] sm:$0xf] %v456
    // Predicated region
    $region34: #{acrobot_mlp_forward.1} parent=1 // pred_check
      _
    $region35: #{acrobot_mlp_forward.1} parent=1 // pred_check_branch
      %459 = sbr.rel (0) target = $region37
    $region36: #{acrobot_mlp_forward.1} parent=1 // pred_region
      _
    $region37: #{acrobot_mlp_forward.1} parent=1 // pred_fallthru
      _
    // Predicated region
    $region38: #{acrobot_mlp_forward.1} parent=1 // pred_check
      _
    $region39: #{acrobot_mlp_forward.1} parent=1 // pred_check_branch
      %461 = sbr.rel (0) target = $region41
    $region40: #{acrobot_mlp_forward.1} parent=1 // pred_region
      _
    $region41: #{acrobot_mlp_forward.1} parent=1 // pred_fallthru
      _
    %462 = vsyncpa [#allocation3], 1
    %463 = vsyncpa [#allocation5], 1
    %464 = vsyncpa [#allocation8], 1

</llo_original>
